<compile_context>
chip_gen: v7x
topology: tpu7x:2x2x1
jax: 0.10.0
libtpu: 0.0.40
codegen_flags: <defaults>
</compile_context>

<pallas_src>
import functools
import math

import jax
import jax.numpy as jnp
from jax.experimental import pallas as pl
from jax.experimental.pallas import tpu as pltpu


def _round_up(n, m):
    return (n + m - 1) // m * m


def _vmem_capacity_bytes():
    try:
        return int(pltpu.get_tpu_info().vmem_capacity_bytes)
    except Exception:
        return 64 * 1024 * 1024  # conservative: v7x per-TC VMEM


def _block_spec(shape, index_map, *, single_buffer=False):
    """BlockSpec helper; single_buffer=True requests Buffered(1) (constant blocks)."""
    if single_buffer:
        try:
            return pl.BlockSpec(shape, index_map, pipeline_mode=pl.Buffered(1))
        except TypeError:  # older API without pipeline_mode -> default buffering
            pass
    return pl.BlockSpec(shape, index_map)


def _mlp_kernel(x_ref, g_ref, w1_ref, b1_ref, w2_ref, b2_ref, o_ref,
                xn_ref, acc_ref, *, eps):
    """Row tile (tm, D) x hidden chunk (TH): LN*(gamma+1) -> Linear -> GELU -> Linear."""
    k = pl.program_id(1)

    # ---- init (once per row tile): LayerNorm in f32, zero the accumulator ----
    @pl.when(k == 0)
    def _():
        x = x_ref[...].astype(jnp.float32)                       # (tm, D)
        mean = jnp.mean(x, axis=-1, keepdims=True)
        var = jnp.mean((x - mean) ** 2, axis=-1, keepdims=True)  # biased (torch LN)
        xn = (x - mean) * jax.lax.rsqrt(var + eps)
        # (gamma + 1) precomputed in the wrapper -> single VPU multiply here.
        xn_ref[...] = xn * g_ref[...].astype(jnp.float32)        # (1, D) broadcast
        acc_ref[...] = jnp.zeros_like(acc_ref)

    # ---- Linear(dim -> TH chunk): MXU in the weights' dtype, f32 accumulate ----
    h = jnp.dot(xn_ref[...].astype(w1_ref.dtype), w1_ref[...],
                preferred_element_type=jnp.float32)               # (tm, TH)
    h = h + b1_ref[...].astype(jnp.float32)

    # ---- GELU: exact erf form (matches nn.GELU() default numerics) ----
    # (tanh-approx would go to the EUP and be cheaper, esp. on v5e, but it
    #  changes numerics vs the PyTorch module, so we keep the exact form.)
    h = 0.5 * h * (1.0 + jax.lax.erf(h * (1.0 / math.sqrt(2.0))))

    # ---- Dropout(0.2): identity in eval mode ----
    # TODO(synk): training-mode dropout would need pltpu.prng_seed/prng_random_bits.

    # ---- Linear(TH chunk -> dim), accumulated over hidden chunks ----
    acc_ref[...] += jnp.dot(h.astype(w2_ref.dtype), w2_ref[...],
                            preferred_element_type=jnp.float32)   # (tm, D)

    # ---- finalize: add b2, write output (lane-dense (tm, D) slab) ----
    @pl.when(k == pl.num_programs(1) - 1)
    def _():
        o_ref[...] = (acc_ref[...] + b2_ref[...].astype(jnp.float32)).astype(o_ref.dtype)
        # Dropout(0.2) after the second Linear: identity in eval mode.


def mlp_forward(x, gamma, w1, b1, w2, b2, *, tile_m=None, tile_h=512,
                eps=1e-5, mxu_dtype=None):
    """x: (batch, seq, dim) -> (batch, seq, dim). Eval-mode MLP forward."""
    B, S, D = x.shape
    H = w1.shape[1]
    M = B * S

    # Optional bf16 MXU path (throughput + halves resident-weight VMEM).
    if mxu_dtype is not None:
        w1 = w1.astype(mxu_dtype)
        w2 = w2.astype(mxu_dtype)

    # --- generation-aware VMEM budget & row-tile size -----------------------
    vmem_cap = _vmem_capacity_bytes()
    vmem_limit = int(vmem_cap * 0.8)          # ~51 MiB on v7x, ~102 MiB on v5e/v6e
    if tile_m is None:
        tile_m = 512 if vmem_cap >= 96 * 1024 * 1024 else 256

    tm = max(8, min(_round_up(tile_m, 8), _round_up(M, 8)))
    Mp = _round_up(M, tm)
    grid_m = Mp // tm

    # --- hidden-axis split ---------------------------------------------------
    if H <= tile_h:
        th, Hp = H, H                          # single chunk, weights fully resident
    else:
        th = _round_up(tile_h, 128)            # lane-dense chunks
        Hp = _round_up(H, th)
    grid_h = Hp // th

    x2 = x.reshape(M, D)
    if Mp != M:
        # Pad rows; zero rows are numerically safe (var + eps > 0), sliced off after.
        x2 = jnp.pad(x2, ((0, Mp - M), (0, 0)))

    if Hp != H:
        # Zero-padded hidden columns/rows contribute GELU(0)=0 -> exact result.
        w1 = jnp.pad(w1, ((0, 0), (0, Hp - H)))
        b1 = jnp.pad(b1, ((0, Hp - H),))
        w2 = jnp.pad(w2, ((0, Hp - H), (0, 0)))

    gamma_p1 = (gamma.astype(jnp.float32) + 1.0).reshape(1, D)   # hoisted (+1)
    b1_2 = b1.reshape(1, Hp)
    b2_2 = b2.reshape(1, D)

    kernel = functools.partial(_mlp_kernel, eps=eps)

    def _nbytes(a):
        return a.size * jnp.dtype(a.dtype).itemsize

    weight_bytes = _nbytes(w1) + _nbytes(w2) + _nbytes(b1_2) + _nbytes(b2_2)
    cost = pl.CostEstimate(
        flops=2 * 2 * Mp * D * Hp,             # two (Mp,D)x(D,Hp)-class matmuls
        transcendentals=Mp * Hp,               # erf in the GELU
        bytes_accessed=int(
            _nbytes(x2) + Mp * D * jnp.dtype(x.dtype).itemsize + _nbytes(gamma_p1)
            + weight_bytes * (grid_m if grid_h > 1 else 1)),
    )

    # Constant-index operands: gamma+1 and b2 always; w1/b1/w2 only when they are
    # not split over the hidden axis (grid_h == 1). Those get single buffers.
    w_resident = (grid_h == 1)
    in_specs = [
        pl.BlockSpec((tm, D), lambda i, k: (i, 0)),                       # x (streamed)
        _block_spec((1, D), lambda i, k: (0, 0), single_buffer=True),     # gamma + 1
        _block_spec((D, th), lambda i, k: (0, k), single_buffer=w_resident),  # w1
        _block_spec((1, th), lambda i, k: (0, k), single_buffer=w_resident),  # b1
        _block_spec((th, D), lambda i, k: (k, 0), single_buffer=w_resident),  # w2
        _block_spec((1, D), lambda i, k: (0, 0), single_buffer=True),     # b2
    ]

    out = pl.pallas_call(
        kernel,
        out_shape=jax.ShapeDtypeStruct((Mp, D), x.dtype),
        grid_spec=pltpu.PrefetchScalarGridSpec(
            num_scalar_prefetch=0,
            grid=(grid_m, grid_h),             # rows parallel, hidden reduction last
            in_specs=in_specs,
            out_specs=pl.BlockSpec((tm, D), lambda i, k: (i, 0)),
            scratch_shapes=[
                pltpu.VMEM((tm, D), jnp.float32),   # normalized activations
                pltpu.VMEM((tm, D), jnp.float32),   # output accumulator
            ],
        ),
        compiler_params=pltpu.CompilerParams(
            dimension_semantics=("parallel", "arbitrary"),
            vmem_limit_bytes=vmem_limit,
        ),
        cost_estimate=cost,
    )(x2, gamma_p1, w1, b1_2, w2, b2_2)

    if Mp != M:
        out = out[:M]
    return out.reshape(B, S, D)


def _reference(x, gamma, w1, b1, w2, b2, eps=1e-5):
    xf = x.astype(jnp.float32)
    mean = jnp.mean(xf, axis=-1, keepdims=True)
    var = jnp.mean((xf - mean) ** 2, axis=-1, keepdims=True)
    xn = (xf - mean) * jax.lax.rsqrt(var + eps) * (gamma + 1.0)
    h = xn @ w1 + b1
    h = 0.5 * h * (1.0 + jax.lax.erf(h / jnp.sqrt(2.0)))
    return (h @ w2 + b2).astype(x.dtype)


if __name__ == "__main__":
    batch, seq, dim, hidden_dim = 2, 8, 32, 64

    key = jax.random.PRNGKey(0)
    kx, kw1, kb1, kw2, kb2 = jax.random.split(key, 5)

    x = jax.random.normal(kx, (batch, seq, dim), dtype=jnp.float32)

    # Parameters (deterministic init; gamma starts at zeros like the module).
    gamma = jnp.zeros((dim,), dtype=jnp.float32)
    lim1 = 1.0 / math.sqrt(dim)
    w1 = jax.random.uniform(kw1, (dim, hidden_dim), jnp.float32, -lim1, lim1)
    b1 = jax.random.uniform(kb1, (hidden_dim,), jnp.float32, -lim1, lim1)
    lim2 = 1.0 / math.sqrt(hidden_dim)
    w2 = jax.random.uniform(kw2, (hidden_dim, dim), jnp.float32, -lim2, lim2)
    b2 = jax.random.uniform(kb2, (dim,), jnp.float32, -lim2, lim2)

    ref = _reference(x, gamma, w1, b1, w2, b2)

    # f32 path: strict check against the reference.
    out = jax.block_until_ready(mlp_forward(x, gamma, w1, b1, w2, b2))
    assert out.shape == (batch, seq, dim)
    assert jnp.allclose(out, ref, atol=1e-5, rtol=1e-5), "mismatch vs reference (f32)"

    # bf16 MXU path (perf config): relaxed tolerance for bf16 matmul operands.
    out_bf16 = jax.block_until_ready(
        mlp_forward(x, gamma, w1, b1, w2, b2, mxu_dtype=jnp.bfloat16))
    assert jnp.allclose(out_bf16, ref, atol=5e-2, rtol=5e-2), "mismatch vs reference (bf16)"

    print("KERNEL_OK")
</pallas_src>

<mosaic_0001>
module attributes {stable_mosaic.version = 11 : i64} {
  func.func @_mlp_kernel(%arg0: i32, %arg1: i32, %arg2: memref<16x32xf32, #tpu.memory_space<vmem>>, %arg3: memref<1x32xf32, #tpu.memory_space<vmem>>, %arg4: memref<32x64xf32, #tpu.memory_space<vmem>>, %arg5: memref<1x64xf32, #tpu.memory_space<vmem>>, %arg6: memref<64x32xf32, #tpu.memory_space<vmem>>, %arg7: memref<1x32xf32, #tpu.memory_space<vmem>>, %arg8: memref<16x32xf32, #tpu.memory_space<vmem>>, %arg9: memref<16x32xf32, #tpu.memory_space<vmem>>, %arg10: memref<16x32xf32, #tpu.memory_space<vmem>>) attributes {dimension_semantics = [#tpu.dimension_semantics<parallel>, #tpu.dimension_semantics<arbitrary>], iteration_bounds = array<i64: 1, 1>, scalar_prefetch = 0 : i64, scratch_operands = 2 : i64, tpu.core_type = #tpu.core_type<tc>, window_params = [{transform_indices = @transform_0, window_bounds = array<i64: 16, 32>}, {pipeline_mode = #tpu.pipeline_mode<synchronous>, transform_indices = @transform_1, window_bounds = array<i64: 1, 32>}, {pipeline_mode = #tpu.pipeline_mode<synchronous>, transform_indices = @transform_2, window_bounds = array<i64: 32, 64>}, {pipeline_mode = #tpu.pipeline_mode<synchronous>, transform_indices = @transform_3, window_bounds = array<i64: 1, 64>}, {pipeline_mode = #tpu.pipeline_mode<synchronous>, transform_indices = @transform_4, window_bounds = array<i64: 64, 32>}, {pipeline_mode = #tpu.pipeline_mode<synchronous>, transform_indices = @transform_5, window_bounds = array<i64: 1, 32>}, {transform_indices = @transform_6, window_bounds = array<i64: 16, 32>}]} {
    %c0_i32 = arith.constant 0 : i32
    %0 = arith.cmpi eq, %arg1, %c0_i32 : i32
    %1 = arith.extui %0 : i1 to i32
    %c0_i32_0 = arith.constant 0 : i32
    %2 = arith.cmpi ne, %1, %c0_i32_0 : i32
    scf.if %2 {
      %c0_18 = arith.constant 0 : index
      %c0_19 = arith.constant 0 : index
      %25 = vector.load %arg2[%c0_18, %c0_19] : memref<16x32xf32, #tpu.memory_space<vmem>>, vector<16x32xf32>
      %cst_20 = arith.constant dense<0.000000e+00> : vector<16xf32>
      %26 = vector.multi_reduction <add>, %25, %cst_20 [1] : vector<16x32xf32> to vector<16xf32>
      %27 = vector.shape_cast %26 : vector<16xf32> to vector<16x1xf32>
      %cst_21 = arith.constant 3.200000e+01 : f32
      %28 = vector.broadcast %cst_21 : f32 to vector<16x1xf32>
      %29 = arith.divf %27, %28 : vector<16x1xf32>
      %30 = vector.broadcast %29 : vector<16x1xf32> to vector<16x32xf32>
      %31 = arith.subf %25, %30 : vector<16x32xf32>
      %32 = arith.mulf %31, %31 : vector<16x32xf32>
      %cst_22 = arith.constant dense<0.000000e+00> : vector<16xf32>
      %33 = vector.multi_reduction <add>, %32, %cst_22 [1] : vector<16x32xf32> to vector<16xf32>
      %34 = vector.shape_cast %33 : vector<16xf32> to vector<16x1xf32>
      %cst_23 = arith.constant 3.200000e+01 : f32
      %35 = vector.broadcast %cst_23 : f32 to vector<16x1xf32>
      %36 = arith.divf %34, %35 : vector<16x1xf32>
      %37 = vector.broadcast %29 : vector<16x1xf32> to vector<16x32xf32>
      %38 = arith.subf %25, %37 : vector<16x32xf32>
      %cst_24 = arith.constant 9.99999974E-6 : f32
      %39 = vector.broadcast %cst_24 : f32 to vector<16x1xf32>
      %40 = arith.addf %36, %39 : vector<16x1xf32>
      %41 = math.rsqrt %40 : vector<16x1xf32>
      %42 = vector.broadcast %41 : vector<16x1xf32> to vector<16x32xf32>
      %43 = arith.mulf %38, %42 : vector<16x32xf32>
      %c0_25 = arith.constant 0 : index
      %c0_26 = arith.constant 0 : index
      %44 = vector.load %arg3[%c0_25, %c0_26] : memref<1x32xf32, #tpu.memory_space<vmem>>, vector<1x32xf32>
      %45 = vector.broadcast %44 : vector<1x32xf32> to vector<16x32xf32>
      %46 = arith.mulf %43, %45 : vector<16x32xf32>
      %c0_27 = arith.constant 0 : index
      %c0_28 = arith.constant 0 : index
      %47 = vector.load %arg9[%c0_27, %c0_28] : memref<16x32xf32, #tpu.memory_space<vmem>>, vector<16x32xf32>
      tpu.vector_store %arg9[%c0_27, %c0_28], %46 {strides = array<i32>} : memref<16x32xf32, #tpu.memory_space<vmem>>, vector<16x32xf32>,
      %cst_29 = arith.constant 0.000000e+00 : f32
      %48 = vector.broadcast %cst_29 : f32 to vector<16x32xf32>
      %c0_30 = arith.constant 0 : index
      %c0_31 = arith.constant 0 : index
      %49 = vector.load %arg10[%c0_30, %c0_31] : memref<16x32xf32, #tpu.memory_space<vmem>>, vector<16x32xf32>
      tpu.vector_store %arg10[%c0_30, %c0_31], %48 {strides = array<i32>} : memref<16x32xf32, #tpu.memory_space<vmem>>, vector<16x32xf32>,
    } else {
    }
    %c0 = arith.constant 0 : index
    %c0_1 = arith.constant 0 : index
    %3 = vector.load %arg9[%c0, %c0_1] : memref<16x32xf32, #tpu.memory_space<vmem>>, vector<16x32xf32>
    %c0_2 = arith.constant 0 : index
    %c0_3 = arith.constant 0 : index
    %4 = vector.load %arg4[%c0_2, %c0_3] : memref<32x64xf32, #tpu.memory_space<vmem>>, vector<32x64xf32>
    %cst = arith.constant dense<0.000000e+00> : vector<16x64xf32>
    %5 = tpu.matmul %3, %4, %cst {dimension_numbers = #tpu.dot_dimension_numbers<[1], [0], [0], [1], [0, 0, 1, 1], [], []>} : vector<16x32xf32>, vector<32x64xf32>, vector<16x64xf32> -> vector<16x64xf32>
    %c0_4 = arith.constant 0 : index
    %c0_5 = arith.constant 0 : index
    %6 = vector.load %arg5[%c0_4, %c0_5] : memref<1x64xf32, #tpu.memory_space<vmem>>, vector<1x64xf32>
    %7 = vector.broadcast %6 : vector<1x64xf32> to vector<16x64xf32>
    %8 = arith.addf %5, %7 : vector<16x64xf32>
    %cst_6 = arith.constant 5.000000e-01 : f32
    %9 = vector.broadcast %cst_6 : f32 to vector<16x64xf32>
    %10 = arith.mulf %9, %8 : vector<16x64xf32>
    %cst_7 = arith.constant 0.707106769 : f32
    %11 = vector.broadcast %cst_7 : f32 to vector<16x64xf32>
    %12 = arith.mulf %8, %11 : vector<16x64xf32>
    %13 = math.erf %12 : vector<16x64xf32>
    %cst_8 = arith.constant 1.000000e+00 : f32
    %14 = vector.broadcast %cst_8 : f32 to vector<16x64xf32>
    %15 = arith.addf %14, %13 : vector<16x64xf32>
    %16 = arith.mulf %10, %15 : vector<16x64xf32>
    %c0_9 = arith.constant 0 : index
    %c0_10 = arith.constant 0 : index
    %17 = vector.load %arg10[%c0_9, %c0_10] : memref<16x32xf32, #tpu.memory_space<vmem>>, vector<16x32xf32>
    %c0_11 = arith.constant 0 : index
    %c0_12 = arith.constant 0 : index
    %18 = vector.load %arg6[%c0_11, %c0_12] : memref<64x32xf32, #tpu.memory_space<vmem>>, vector<64x32xf32>
    %cst_13 = arith.constant dense<0.000000e+00> : vector<16x32xf32>
    %19 = tpu.matmul %16, %18, %cst_13 {dimension_numbers = #tpu.dot_dimension_numbers<[1], [0], [0], [1], [0, 0, 1, 1], [], []>} : vector<16x64xf32>, vector<64x32xf32>, vector<16x32xf32> -> vector<16x32xf32>
    %20 = arith.addf %17, %19 : vector<16x32xf32>
    %c0_14 = arith.constant 0 : index
    %c0_15 = arith.constant 0 : index
    %21 = vector.load %arg10[%c0_14, %c0_15] : memref<16x32xf32, #tpu.memory_space<vmem>>, vector<16x32xf32>
    tpu.vector_store %arg10[%c0_14, %c0_15], %20 {strides = array<i32>} : memref<16x32xf32, #tpu.memory_space<vmem>>, vector<16x32xf32>,
    %c0_i32_16 = arith.constant 0 : i32
    %22 = arith.cmpi eq, %arg1, %c0_i32_16 : i32
    %23 = arith.extui %22 : i1 to i32
    %c0_i32_17 = arith.constant 0 : i32
    %24 = arith.cmpi ne, %23, %c0_i32_17 : i32
    scf.if %24 {
      %c0_18 = arith.constant 0 : index
      %c0_19 = arith.constant 0 : index
      %25 = vector.load %arg10[%c0_18, %c0_19] : memref<16x32xf32, #tpu.memory_space<vmem>>, vector<16x32xf32>
      %c0_20 = arith.constant 0 : index
      %c0_21 = arith.constant 0 : index
      %26 = vector.load %arg7[%c0_20, %c0_21] : memref<1x32xf32, #tpu.memory_space<vmem>>, vector<1x32xf32>
      %27 = vector.broadcast %26 : vector<1x32xf32> to vector<16x32xf32>
      %28 = arith.addf %25, %27 : vector<16x32xf32>
      %c0_22 = arith.constant 0 : index
      %c0_23 = arith.constant 0 : index
      %29 = vector.load %arg8[%c0_22, %c0_23] : memref<16x32xf32, #tpu.memory_space<vmem>>, vector<16x32xf32>
      tpu.vector_store %arg8[%c0_22, %c0_23], %28 {strides = array<i32>} : memref<16x32xf32, #tpu.memory_space<vmem>>, vector<16x32xf32>,
    } else {
    }
    return
  }
  func.func @transform_0(%arg0: i32, %arg1: i32) -> (i32, i32) {
    %c0_i32 = arith.constant 0 : i32
    %c0_i32_0 = arith.constant 0 : i32
    return %arg0, %c0_i32 : i32, i32
  }
  func.func @transform_1(%arg0: i32, %arg1: i32) -> (i32, i32) {
    %c0_i32 = arith.constant 0 : i32
    %c0_i32_0 = arith.constant 0 : i32
    %c0_i32_1 = arith.constant 0 : i32
    return %c0_i32, %c0_i32_0 : i32, i32
  }
  func.func @transform_2(%arg0: i32, %arg1: i32) -> (i32, i32) {
    %c0_i32 = arith.constant 0 : i32
    %c0_i32_0 = arith.constant 0 : i32
    return %c0_i32, %arg1 : i32, i32
  }
  func.func @transform_3(%arg0: i32, %arg1: i32) -> (i32, i32) {
    %c0_i32 = arith.constant 0 : i32
    %c0_i32_0 = arith.constant 0 : i32
    return %c0_i32, %arg1 : i32, i32
  }
  func.func @transform_4(%arg0: i32, %arg1: i32) -> (i32, i32) {
    %c0_i32 = arith.constant 0 : i32
    %c0_i32_0 = arith.constant 0 : i32
    return %arg1, %c0_i32 : i32, i32
  }
  func.func @transform_5(%arg0: i32, %arg1: i32) -> (i32, i32) {
    %c0_i32 = arith.constant 0 : i32
    %c0_i32_0 = arith.constant 0 : i32
    %c0_i32_1 = arith.constant 0 : i32
    return %c0_i32, %c0_i32_0 : i32, i32
  }
  func.func @transform_6(%arg0: i32, %arg1: i32) -> (i32, i32) {
    %c0_i32 = arith.constant 0 : i32
    %c0_i32_0 = arith.constant 0 : i32
    return %arg0, %c0_i32 : i32, i32
  }
}

</mosaic_0001>

<llo_original>
// kernel: tpu_custom_call.1
$region0: #{tpu_custom_call.1}
  #allocation0 [shape = 'u32[]', space=smem, size = 0x4, offset = 0x4, fixed_abs, tag = 'smem constant byte address 0x4 - core index']
  #allocation1 [shape = 'u32[144,128]{1,0:T(1,128)}', space=vmem, size = 0x12000, scoped, tag = 'internal scratch']
  #allocation2 [shape = 'f32[16,32]{1,0:T(8,128)}', space=vmem, size = 0x2000, scoped, tag = 'scratch operand']
  #allocation3 [shape = 'f32[16,32]{1,0:T(8,128)}', space=vmem, size = 0x2000, scoped, tag = 'scratch operand']
  %s0 = inlined_call_operand.vmem [shape: f32[16,32], index: 0, kind: input, shape index: {}]
  %s1 = inlined_call_operand.vmem [shape: f32[1,32], index: 1, kind: input, shape index: {}]
  %s2 = inlined_call_operand.vmem [shape: f32[32,64], index: 2, kind: input, shape index: {}]
  %s3 = inlined_call_operand.vmem [shape: f32[1,64], index: 3, kind: input, shape index: {}]
  %s4 = inlined_call_operand.vmem [shape: f32[64,32], index: 4, kind: input, shape index: {}]
  %s5 = inlined_call_operand.vmem [shape: f32[1,32], index: 5, kind: input, shape index: {}]
  %s6 = inlined_call_operand.hbm [shape: f32[16,32], index: 6, kind: output, shape index: {}]
  %s7 = sld [smem:[#allocation0]]
  $region42: #{tpu_custom_call.1} parent=0
    _
  %s9 = ssub.s32 1, %s7
  %s10 = scalar_select 0, %s9, %s7
  $region1: #{tpu_custom_call.1} parent=0
    #allocation4 [shape = 'u8[8192]{0}', space=vmem, size = 0x2000, scoped, tag = 'output window, operand 0, single buffered']
    #allocation5 [shape = 's32[1]{0}', space=sflag, size = 0x4, scoped, tag = 'scoped memory for tpu_custom_call.1']
    %11 = vsyncpa [#allocation5], 0
    // Predicated region
    $region2: #{tpu_custom_call.1} parent=1 // pred_check
      _
    $region3: #{tpu_custom_call.1} parent=1 // pred_check_branch
      %13 = sbr.rel (0) target = $region5
    $region4: #{tpu_custom_call.1} parent=1 // pred_region
      _
    $region5: #{tpu_custom_call.1} parent=1 // pred_fallthru
      _
    // Predicated region
    $region6: #{tpu_custom_call.1} parent=1 // pred_check
      _
    $region7: #{tpu_custom_call.1} parent=1 // pred_check_branch
      %15 = sbr.rel (0) target = $region9
    $region8: #{tpu_custom_call.1} parent=1 // pred_region
      _
    $region9: #{tpu_custom_call.1} parent=1 // pred_fallthru
      _
    // Predicated region
    $region10: #{tpu_custom_call.1} parent=1 // pred_check
      _
    $region11: #{tpu_custom_call.1} parent=1 // pred_check_branch
      %17 = sbr.rel (0) target = $region13
    $region12: #{tpu_custom_call.1} parent=1 // pred_region
      _
    $region13: #{tpu_custom_call.1} parent=1 // pred_fallthru
      _
    // Predicated region
    $region14: #{tpu_custom_call.1} parent=1 // pred_check
      _
    $region15: #{tpu_custom_call.1} parent=1 // pred_check_branch
      %19 = sbr.rel (0) target = $region17
    $region16: #{tpu_custom_call.1} parent=1 // pred_region
      _
    $region17: #{tpu_custom_call.1} parent=1 // pred_fallthru
      _
    // Predicated region
    $region18: #{tpu_custom_call.1} parent=1 // pred_check
      _
    $region19: #{tpu_custom_call.1} parent=1 // pred_check_branch
      %21 = sbr.rel (0) target = $region21
    $region20: #{tpu_custom_call.1} parent=1 // pred_region
      _
    $region21: #{tpu_custom_call.1} parent=1 // pred_fallthru
      _
    // Predicated region
    $region22: #{tpu_custom_call.1} parent=1 // pred_check
      _
    $region23: #{tpu_custom_call.1} parent=1 // pred_check_branch
      %23 = sbr.rel (0) target = $region25
    $region24: #{tpu_custom_call.1} parent=1 // pred_region
      _
    $region25: #{tpu_custom_call.1} parent=1 // pred_fallthru
      _
    %p24 = scmp.eq.s32.totalorder 0, 0
    // Predicated region
    $region26: #{tpu_custom_call.1} parent=1 // pred_check
      %p25 = pneg %p24
    $region27: #{tpu_custom_call.1} parent=1 // pred_check_branch
      %27 = sbr.rel (%p25) target = $region29
    $region28: #{tpu_custom_call.1} parent=1 // pred_region
      %v28 = vld [vmem:[%s0] sm:$0xff]
      %v29 = vld [vmem:[%s0 + $0x8] sm:$0xff]
      %vm30 = vcmask 261120
      %v31 = vsel %vm30, %v28, 0.0
      %32 = vadd.xlane.f32.xlu0 %v31
      %v33 = vpop.xlane.xlu0 %32
      %v34 = vsel %vm30, %v29, 0.0
      %35 = vadd.xlane.f32.xlu0 %v34
      %v36 = vpop.xlane.xlu0 %35
      %v37 = vrcp.pop 32.0
      %v38 = vmul.f32 %v33, %v37
      %v39 = vmul.f32 %v36, %v37
      %v40 = vsub.f32 %v28, %v38
      %v41 = vsub.f32 %v29, %v39
      %v42 = vmul.f32 %v40, %v40
      %v43 = vmul.f32 %v41, %v41
      %v44 = vsel %vm30, %v42, 0.0
      %45 = vadd.xlane.f32.xlu0 %v44
      %v46 = vpop.xlane.xlu0 %45
      %v47 = vsel %vm30, %v43, 0.0
      %48 = vadd.xlane.f32.xlu0 %v47
      %v49 = vpop.xlane.xlu0 %48
      %v50 = vmul.f32 %v46, %v37
      %v51 = vmul.f32 %v49, %v37
      %v52 = vadd.f32 %v50, 1e-05
      %v53 = vadd.f32 %v51, 1e-05
      %v54 = vrsqrt.pop %v52
      %v55 = vrsqrt.pop %v53
      %v56 = vmul.f32 %v40, %v54
      %v57 = vmul.f32 %v41, %v55
      %v58 = vld [vmem:[%s1] sm:$0x1]
      %v60 = vlaneseq
      %v61 = vshrl.u32 %v60, 7
      %v62 = vsub.s32 0, %v61
      %v63 = vrot.slane %v58, %v62
      %v65 = vmul.f32 %v56, %v63
      %v66 = vmul.f32 %v57, %v63
      %67 = vst.msk [vmem:[#allocation2] sm:$0xff] %vm30, %v65
      %68 = vst.msk [vmem:[#allocation2 + $0x8] sm:$0xff] %vm30, %v66
      %69 = vst.msk [vmem:[#allocation3] sm:$0xff] %vm30, 0.0
      %70 = vst.msk [vmem:[#allocation3 + $0x8] sm:$0xff] %vm30, 0.0
    $region29: #{tpu_custom_call.1} parent=1 // pred_fallthru
      _
    %v71 = vld [vmem:[#allocation2] sm:$0xff]
    %v72 = vld [vmem:[#allocation2 + $0x8] sm:$0xff]
    %v73 = vld [vmem:[%s2] sm:$0xff]
    %v74 = vld [vmem:[%s2 + $0x8] sm:$0xff]
    %v75 = vld [vmem:[%s2 + $0x10] sm:$0xff]
    %v76 = vld [vmem:[%s2 + $0x18] sm:$0xff]
    %v77 = vld [vmem:[%s3] sm:$0x1]
    %v79 = vlaneseq
    %v80 = vshrl.u32 %v79, 7
    %v81 = vsub.s32 0, %v80
    %v82 = vrot.slane %v77, %v81
    %vm84 = vcmask 261120
    %v86 = vsel %vm84, %v71, 0
    %v89 = vsel %vm84, %v72, 0
    %91 = vmatprep.subr.mxu0 0.0
    %92 = vmatpush1.msra.mxu0 %v73
    %93 = vmatprep.subr.mxu0 0.0
    %94 = vmatpush1.msra.mxu0 %v74
    %95 = vmatprep.subr.mxu0 0.0
    %96 = vmatpush1.msra.mxu0 %v75
    %97 = vmatprep.subr.mxu0 0.0
    %98 = vmatpush1.msra.mxu0 %v76
    %99 = vmatprep.subr.mxu0 0.0
    %100 = vmatpush1.msra.mxu0 0.0
    %101 = vmatprep.subr.mxu0 0.0
    %102 = vmatpush1.msra.mxu0 0.0
    %103 = vmatprep.subr.mxu0 0.0
    %104 = vmatpush1.msra.mxu0 0.0
    %105 = vmatprep.subr.mxu0 0.0
    %106 = vmatpush1.msra.mxu0 0.0
    %107 = vmatprep.subr.mxu0 0.0
    %108 = vmatpush1.msra.mxu0 0.0
    %109 = vmatprep.subr.mxu0 0.0
    %110 = vmatpush1.msra.mxu0 0.0
    %111 = vmatprep.subr.mxu0 0.0
    %112 = vmatpush1.msra.mxu0 0.0
    %113 = vmatprep.subr.mxu0 0.0
    %114 = vmatpush1.msra.mxu0 0.0
    %115 = vmatprep.subr.mxu0 0.0
    %116 = vmatpush1.msra.mxu0 0.0
    %117 = vmatprep.subr.mxu0 0.0
    %118 = vmatpush1.msra.mxu0 0.0
    %119 = vmatprep.subr.mxu0 0.0
    %120 = vmatpush1.msra.mxu0 0.0
    %121 = vmatprep.subr.mxu0 0.0
    %122 = vmatpush1.msra.mxu0 0.0
    %123 = vmatprep.subr.mxu0 0.0
    %124 = vmatpush1.msra.mxu0 0.0
    %125 = vmatprep.subr.mxu0 0.0
    %126 = vmatpush1.msra.mxu0 0.0
    %127 = vmatprep.subr.mxu0 0.0
    %128 = vmatpush1.msra.mxu0 0.0
    %129 = vmatprep.subr.mxu0 0.0
    %130 = vmatpush1.msra.mxu0 0.0
    %131 = vmatprep.subr.mxu0 0.0
    %132 = vmatpush1.msra.mxu0 0.0
    %133 = vmatprep.subr.mxu0 0.0
    %134 = vmatpush1.msra.mxu0 0.0
    %135 = vmatprep.subr.mxu0 0.0
    %136 = vmatpush1.msra.mxu0 0.0
    %137 = vmatprep.subr.mxu0 0.0
    %138 = vmatpush1.msra.mxu0 0.0
    %139 = vmatprep.subr.mxu0 0.0
    %140 = vmatpush1.msra.mxu0 0.0
    %141 = vmatprep.subr.mxu0 0.0
    %142 = vmatpush1.msra.mxu0 0.0
    %143 = vmatprep.subr.mxu0 0.0
    %144 = vmatpush1.msra.mxu0 0.0
    %145 = vmatprep.subr.mxu0 0.0
    %146 = vmatpush1.msra.mxu0 0.0
    %147 = vmatprep.subr.mxu0 0.0
    %148 = vmatpush1.msra.mxu0 0.0
    %149 = vmatprep.subr.mxu0 0.0
    %150 = vmatpush1.msra.mxu0 0.0
    %151 = vmatprep.subr.mxu0 0.0
    %152 = vmatpush1.msra.mxu0 0.0
    %153 = vmatprep.subr.mxu0 0.0
    %154 = vmatpush1.msra.mxu0 0.0
    %155 = vmatprep.mubr.f32.mxu0 0.0
    %156 = vmatmul.mubr.f32.gmra.mrb[0].mxu0 %v86
    %v157 = vpop.f32.mrb[0].mxu0
    %v158 = vadd.f32 %v82, %v157
    %v159 = vpop.f32.mrb[0].mxu0
    %160 = vmatprep.mubr.f32.mxu0 0.0
    %161 = vmatmul.mubr.f32.gmra.mrb[0].mxu0 %v89
    %v162 = vpop.f32.mrb[0].mxu0
    %v163 = vadd.f32 %v82, %v162
    %v164 = vpop.f32.mrb[0].mxu0
    %165 = vdwg.mxu0
    %v166 = vmul.f32 %v158, 0.5
    %v167 = vmul.f32 %v163, 0.5
    %v168 = vmul.f32 %v158, 0.70710677
    %v169 = vmul.f32 %v163, 0.70710677
    %v170 = verf.f32.pop %v168
    %v171 = verf.f32.pop %v169
    %v172 = vadd.f32 %v170, 1.0
    %v173 = vadd.f32 %v171, 1.0
    %v174 = vmul.f32 %v166, %v172
    %v175 = vmul.f32 %v167, %v173
    %v176 = vld [vmem:[#allocation3] sm:$0xff]
    %v177 = vld [vmem:[#allocation3 + $0x8] sm:$0xff]
    %v178 = vld [vmem:[%s4] sm:$0xff]
    %v179 = vld [vmem:[%s4 + $0x8] sm:$0xff]
    %v180 = vld [vmem:[%s4 + $0x10] sm:$0xff]
    %v181 = vld [vmem:[%s4 + $0x18] sm:$0xff]
    %v182 = vld [vmem:[%s4 + $0x20] sm:$0xff]
    %v183 = vld [vmem:[%s4 + $0x28] sm:$0xff]
    %v184 = vld [vmem:[%s4 + $0x30] sm:$0xff]
    %v185 = vld [vmem:[%s4 + $0x38] sm:$0xff]
    %vm186 = vcmask 523264
    %v188 = vsel %vm186, %v174, 0
    %v191 = vsel %vm186, %v175, 0
    %193 = vmatprep.subr.mxu0 0.0
    %194 = vmatpush1.msra.mxu0 %v178
    %195 = vmatprep.subr.mxu0 0.0
    %196 = vmatpush1.msra.mxu0 %v179
    %197 = vmatprep.subr.mxu0 0.0
    %198 = vmatpush1.msra.mxu0 %v180
    %199 = vmatprep.subr.mxu0 0.0
    %200 = vmatpush1.msra.mxu0 %v181
    %201 = vmatprep.subr.mxu0 0.0
    %202 = vmatpush1.msra.mxu0 %v182
    %203 = vmatprep.subr.mxu0 0.0
    %204 = vmatpush1.msra.mxu0 %v183
    %205 = vmatprep.subr.mxu0 0.0
    %206 = vmatpush1.msra.mxu0 %v184
    %207 = vmatprep.subr.mxu0 0.0
    %208 = vmatpush1.msra.mxu0 %v185
    %209 = vmatprep.subr.mxu0 0.0
    %210 = vmatpush1.msra.mxu0 0.0
    %211 = vmatprep.subr.mxu0 0.0
    %212 = vmatpush1.msra.mxu0 0.0
    %213 = vmatprep.subr.mxu0 0.0
    %214 = vmatpush1.msra.mxu0 0.0
    %215 = vmatprep.subr.mxu0 0.0
    %216 = vmatpush1.msra.mxu0 0.0
    %217 = vmatprep.subr.mxu0 0.0
    %218 = vmatpush1.msra.mxu0 0.0
    %219 = vmatprep.subr.mxu0 0.0
    %220 = vmatpush1.msra.mxu0 0.0
    %221 = vmatprep.subr.mxu0 0.0
    %222 = vmatpush1.msra.mxu0 0.0
    %223 = vmatprep.subr.mxu0 0.0
    %224 = vmatpush1.msra.mxu0 0.0
    %225 = vmatprep.subr.mxu0 0.0
    %226 = vmatpush1.msra.mxu0 0.0
    %227 = vmatprep.subr.mxu0 0.0
    %228 = vmatpush1.msra.mxu0 0.0
    %229 = vmatprep.subr.mxu0 0.0
    %230 = vmatpush1.msra.mxu0 0.0
    %231 = vmatprep.subr.mxu0 0.0
    %232 = vmatpush1.msra.mxu0 0.0
    %233 = vmatprep.subr.mxu0 0.0
    %234 = vmatpush1.msra.mxu0 0.0
    %235 = vmatprep.subr.mxu0 0.0
    %236 = vmatpush1.msra.mxu0 0.0
    %237 = vmatprep.subr.mxu0 0.0
    %238 = vmatpush1.msra.mxu0 0.0
    %239 = vmatprep.subr.mxu0 0.0
    %240 = vmatpush1.msra.mxu0 0.0
    %241 = vmatprep.subr.mxu0 0.0
    %242 = vmatpush1.msra.mxu0 0.0
    %243 = vmatprep.subr.mxu0 0.0
    %244 = vmatpush1.msra.mxu0 0.0
    %245 = vmatprep.subr.mxu0 0.0
    %246 = vmatpush1.msra.mxu0 0.0
    %247 = vmatprep.subr.mxu0 0.0
    %248 = vmatpush1.msra.mxu0 0.0
    %249 = vmatprep.subr.mxu0 0.0
    %250 = vmatpush1.msra.mxu0 0.0
    %251 = vmatprep.subr.mxu0 0.0
    %252 = vmatpush1.msra.mxu0 0.0
    %253 = vmatprep.subr.mxu0 0.0
    %254 = vmatpush1.msra.mxu0 0.0
    %255 = vmatprep.subr.mxu0 0.0
    %256 = vmatpush1.msra.mxu0 0.0
    %257 = vmatprep.mubr.f32.mxu0 0.0
    %258 = vmatmul.mubr.f32.gmra.mrb[0].mxu0 %v188
    %v259 = vpop.f32.mrb[0].mxu0
    %v260 = vadd.f32 0.0, %v259
    %v261 = vpop.f32.mrb[0].mxu0
    %262 = vmatprep.mubr.f32.mxu0 0.0
    %263 = vmatmul.mubr.f32.gmra.mrb[0].mxu0 %v191
    %v264 = vpop.f32.mrb[0].mxu0
    %v265 = vadd.f32 0.0, %v264
    %v266 = vpop.f32.mrb[0].mxu0
    %267 = vdwg.mxu0
    %v268 = vadd.f32 %v176, %v260
    %v269 = vadd.f32 %v177, %v265
    %270 = vst.msk [vmem:[#allocation3] sm:$0xff] %vm84, %v268
    %271 = vst.msk [vmem:[#allocation3 + $0x8] sm:$0xff] %vm84, %v269
    // Predicated region
    $region30: #{tpu_custom_call.1} parent=1 // pred_check
      %p272 = pneg %p24
    $region31: #{tpu_custom_call.1} parent=1 // pred_check_branch
      %274 = sbr.rel (%p272) target = $region33
    $region32: #{tpu_custom_call.1} parent=1 // pred_region
      %v275 = vld [vmem:[#allocation3] sm:$0xff]
      %v276 = vld [vmem:[#allocation3 + $0x8] sm:$0xff]
      %v277 = vld [vmem:[%s5] sm:$0x1]
      %v279 = vlaneseq
      %v280 = vshrl.u32 %v279, 7
      %v281 = vsub.s32 0, %v280
      %v282 = vrot.slane %v277, %v281
      %v284 = vadd.f32 %v275, %v282
      %v285 = vadd.f32 %v276, %v282
      %286 = vst.msk [vmem:[#allocation4] sm:$0xff] %vm84, %v284
      %287 = vst.msk [vmem:[#allocation4 + $0x8] sm:$0xff] %vm84, %v285
    $region33: #{tpu_custom_call.1} parent=1 // pred_fallthru
      _
    // Predicated region
    $region34: #{tpu_custom_call.1} parent=1 // pred_check
      _
    $region35: #{tpu_custom_call.1} parent=1 // pred_check_branch
      %289 = sbr.rel (0) target = $region37
    $region36: #{tpu_custom_call.1} parent=1 // pred_region
      %s291 = ssub.s32 256, 256
      %292 = vsyncadd [#allocation5], %s291
      %s293 = sshll.u32 [#allocation4], 4
      %s294 = int_to_ptr.vmem [resolvable:$true] %s293
      %299 = dma.vmem_to_hbm [thread:$0]  %s294, 256, %s6, [#allocation5], 128, 128, 8
    $region37: #{tpu_custom_call.1} parent=1 // pred_fallthru
      _
    // Predicated region
    $region38: #{tpu_custom_call.1} parent=1 // pred_check
      _
    $region39: #{tpu_custom_call.1} parent=1 // pred_check_branch
      %301 = sbr.rel (0) target = $region41
    $region40: #{tpu_custom_call.1} parent=1 // pred_region
      %302 = dma.done [#allocation5], 256
    $region41: #{tpu_custom_call.1} parent=1 // pred_fallthru
      _
    %303 = vsyncpa [#allocation5], 1

</llo_original>
